<compile_context>
chip_gen: v5e
topology: v5e:2x2
jax: 0.10.0
libtpu: 0.0.40
codegen_flags: <defaults>
</compile_context>

<pallas_src>
import functools

import numpy as np
import jax
import jax.numpy as jnp
from jax import lax
from jax.experimental import pallas as pl
from jax.experimental.pallas import tpu as pltpu


def _embeddings_kernel(ids_ref, w_hbm, pos_ref, g_ref, b_ref, o_ref,
                       wbuf, sem, *, seq_tile, seq_len, n_chunks, eps):
    # ids_ref : SMEM (B*S,) int32 token ids (scalar-prefetched, pre-clamped to [0, V-1])
    # w_hbm   : (V, D) word-embedding table left in HBM (memory_space=pl.ANY)
    # pos_ref : (seq_tile, D) position-embedding rows for this sequence block
    # g_ref/b_ref : (1, D) LayerNorm gamma / beta (f32, pre-cast in the wrapper)
    # o_ref   : (1, seq_tile, D) output block
    # wbuf    : (seq_tile, D) VMEM scratch for the gathered word rows (table dtype)
    # sem     : (n_chunks,) DMA semaphores, one per row-chunk
    j = pl.program_id(0)              # sequence-block index (outer grid axis)
    b = pl.program_id(1)              # batch index (inner grid axis)
    base = b * seq_len + j * seq_tile
    chunk = seq_tile // n_chunks      # static; multiple of 8 when n_chunks > 1

    # ---- Issue phase: start every row gather of the block up front so the DMA engine
    #      stays busy; chunk c's rows all signal sem[c].  Partially unrolled so the
    #      descriptor (vector-misc) slot and scalar address math stay fed.
    def _issue_chunk(c):              # c is a static Python int
        def body(r, carry):
            row = c * chunk + r
            tok = ids_ref[base + row]
            pltpu.make_async_copy(w_hbm.at[pl.ds(tok, 1)],
                                  wbuf.at[pl.ds(row, 1)],
                                  sem.at[c]).start()
            return carry
        lax.fori_loop(0, chunk, body, 0, unroll=8)

    for c in range(n_chunks):
        _issue_chunk(c)

    # ---- Wait + compute per chunk: the LayerNorm of chunk c overlaps the in-flight
    #      DMAs of chunks > c.  The aggregate wait below is sound because every row copy
    #      of chunk c transferred exactly D*itemsize bytes into sem[c], and the wait
    #      descriptor covers chunk * D * itemsize bytes of the same dtype.
    g = g_ref[...]
    be = b_ref[...]
    for c in range(n_chunks):
        lo = c * chunk                # static
        pltpu.make_async_copy(wbuf.at[pl.ds(lo, chunk)],
                              wbuf.at[pl.ds(lo, chunk)],
                              sem.at[c]).wait()
        x = (wbuf[pl.ds(lo, chunk), :].astype(jnp.float32)
             + pos_ref[pl.ds(lo, chunk), :].astype(jnp.float32))        # (chunk, D)
        mean = jnp.mean(x, axis=-1, keepdims=True)
        diff = x - mean
        var = jnp.mean(diff * diff, axis=-1, keepdims=True)
        y = diff * lax.rsqrt(var + eps)
        y = y * g + be
        o_ref[0, pl.ds(lo, chunk), :] = y.astype(o_ref.dtype)
    # TODO(synk): nn.Dropout is identity in eval mode; training-mode dropout and the
    # inputs_embeds path are not implemented.


def _pick_seq_tile(S, D, w_itemsize, pos_itemsize, out_itemsize,
                   budget_bytes=20 * 1024 * 1024):
    """Largest tile that divides S and keeps per-step VMEM under budget."""
    for t in (512, 256, 128, 64, 32, 16, 8):
        if t <= S and S % t == 0:
            per_step = t * D * (w_itemsize + 2 * pos_itemsize + 2 * out_itemsize)
            if per_step <= budget_bytes:
                return t
    return S   # full-extent block (allowed even when S is not a multiple of 8)


def _pick_n_chunks(seq_tile):
    """Number of gather chunks; chunk size must stay a multiple of 8 rows."""
    for n in (4, 2):
        if seq_tile % (8 * n) == 0:
            return n
    return 1


def embeddings_forward(input_ids, word_table, pos_table, gamma, beta,
                       *, eps=1e-12, out_dtype=jnp.float32, seq_tile=None):
    """input_ids: (B, S) int; returns (B, S, D) in `out_dtype` (bf16 halves writeback)."""
    B, S = input_ids.shape
    V, D = word_table.shape
    assert S <= pos_table.shape[0], "sequence length exceeds max_position_embeddings"

    # Clamp ids (gather-style semantics; also guarantees in-bounds DMA source offsets)
    # and flatten to 1-D so the SMEM scalar-prefetch slab is not padded along batch.
    ids = jnp.clip(input_ids.astype(jnp.int32), 0, V - 1).reshape(B * S)
    pos_slab = pos_table[:S]                             # DistilBERT: position_ids = arange(S)
    gamma2 = gamma.reshape(1, D).astype(jnp.float32)     # hoist casts out of the kernel body
    beta2 = beta.reshape(1, D).astype(jnp.float32)

    if seq_tile is None:
        seq_tile = _pick_seq_tile(
            S, D,
            jnp.dtype(word_table.dtype).itemsize,
            jnp.dtype(pos_slab.dtype).itemsize,
            jnp.dtype(out_dtype).itemsize)
    assert S % seq_tile == 0, "seq_tile must divide the sequence length"
    n_chunks = _pick_n_chunks(seq_tile)

    grid = (S // seq_tile, B)                            # j (seq block) outer, b inner

    kernel = functools.partial(_embeddings_kernel, seq_tile=seq_tile, seq_len=S,
                               n_chunks=n_chunks, eps=eps)

    out = pl.pallas_call(
        kernel,
        out_shape=jax.ShapeDtypeStruct((B, S, D), out_dtype),
        grid_spec=pltpu.PrefetchScalarGridSpec(
            num_scalar_prefetch=1,
            grid=grid,
            in_specs=[
                pl.BlockSpec(memory_space=pl.ANY),                       # word table stays in HBM
                pl.BlockSpec((seq_tile, D), lambda j, b, ids: (j, 0)),   # pos rows: refetched per j only
                pl.BlockSpec((1, D), lambda j, b, ids: (0, 0)),          # gamma (resident)
                pl.BlockSpec((1, D), lambda j, b, ids: (0, 0)),          # beta  (resident)
            ],
            out_specs=pl.BlockSpec((1, seq_tile, D), lambda j, b, ids: (b, j, 0)),
            scratch_shapes=[
                pltpu.VMEM((seq_tile, D), word_table.dtype),             # gathered word rows
                pltpu.SemaphoreType.DMA((n_chunks,)),
            ],
        ),
        compiler_params=pltpu.CompilerParams(
            dimension_semantics=("parallel", "parallel"),
            vmem_limit_bytes=32 * 1024 * 1024),
    )(ids, word_table, pos_slab, gamma2, beta2)
    return out


def _reference(input_ids, word_table, pos_table, gamma, beta, eps=1e-12):
    B, S = input_ids.shape
    w = jnp.take(word_table, input_ids, axis=0)                 # (B, S, D)
    p = jnp.take(pos_table, jnp.arange(S), axis=0)[None, :, :]  # (1, S, D)
    x = w + p
    mean = jnp.mean(x, axis=-1, keepdims=True)
    var = jnp.mean((x - mean) ** 2, axis=-1, keepdims=True)
    return (x - mean) * jax.lax.rsqrt(var + eps) * gamma + beta


if __name__ == "__main__":
    # Small, deterministic config consistent with the module's __init__ shapes.
    vocab_size = 50
    max_position_embeddings = 16
    dim = 32
    pad_token_id = 0
    B, S = 2, 16

    key = jax.random.PRNGKey(0)
    k_w, k_p, k_g, k_b, k_ids = jax.random.split(key, 5)

    word_table = jax.random.normal(k_w, (vocab_size, dim), dtype=jnp.float32) * 0.02
    # nn.Embedding(padding_idx=pad_token_id): the pad row is zeros.
    word_table = word_table.at[pad_token_id].set(0.0)
    pos_table = jax.random.normal(k_p, (max_position_embeddings, dim), dtype=jnp.float32) * 0.02
    gamma = jnp.ones((dim,), dtype=jnp.float32) + 0.1 * jax.random.normal(k_g, (dim,), dtype=jnp.float32)
    beta = 0.1 * jax.random.normal(k_b, (dim,), dtype=jnp.float32)

    input_ids = jax.random.randint(k_ids, (B, S), 0, vocab_size, dtype=jnp.int32)

    ref = _reference(input_ids, word_table, pos_table, gamma, beta)

    # Explicit small tile: exercises multiple seq-blocks + batch grid axes (single-chunk gather).
    out = embeddings_forward(input_ids, word_table, pos_table, gamma, beta, seq_tile=8)
    out = jax.block_until_ready(out)
    np.testing.assert_allclose(np.asarray(out), np.asarray(ref), rtol=1e-5, atol=1e-5)
    assert out.shape == (B, S, dim) and out.dtype == jnp.float32

    # Auto-picked tile (seq_tile=16 here): exercises the chunked gather / per-chunk
    # aggregate-wait path (n_chunks=2).
    out2 = embeddings_forward(input_ids, word_table, pos_table, gamma, beta)
    out2 = jax.block_until_ready(out2)
    np.testing.assert_allclose(np.asarray(out2), np.asarray(ref), rtol=1e-5, atol=1e-5)

    print("KERNEL_OK")
</pallas_src>

<mosaic_0001>
module attributes {stable_mosaic.version = 11 : i64} {
  func.func @_embeddings_kernel(%arg0: i32, %arg1: i32, %arg2: memref<32xi32, #tpu.memory_space<smem>>, %arg3: memref<50x32xf32, #tpu.memory_space<any>>, %arg4: memref<8x32xf32, #tpu.memory_space<vmem>>, %arg5: memref<1x32xf32, #tpu.memory_space<vmem>>, %arg6: memref<1x32xf32, #tpu.memory_space<vmem>>, %arg7: memref<1x8x32xf32, #tpu.memory_space<vmem>>, %arg8: memref<8x32xf32, #tpu.memory_space<vmem>>, %arg9: memref<1x!tpu.dma_semaphore, #tpu.memory_space<semaphore_mem>>) attributes {dimension_semantics = [#tpu.dimension_semantics<parallel>, #tpu.dimension_semantics<parallel>], iteration_bounds = array<i64: 2, 2>, scalar_prefetch = 1 : i64, scratch_operands = 2 : i64, tpu.core_type = #tpu.core_type<tc>, window_params = [{}, {transform_indices = @transform_1, window_bounds = array<i64: 8, 32>}, {pipeline_mode = #tpu.pipeline_mode<synchronous>, transform_indices = @transform_2, window_bounds = array<i64: 1, 32>}, {pipeline_mode = #tpu.pipeline_mode<synchronous>, transform_indices = @transform_3, window_bounds = array<i64: 1, 32>}, {transform_indices = @transform_4, window_bounds = array<i64: 1, 8, 32>}]} {
    %c16_i32 = arith.constant 16 : i32
    %0 = arith.muli %arg1, %c16_i32 : i32
    %c8_i32 = arith.constant 8 : i32
    %1 = arith.muli %arg0, %c8_i32 : i32
    %2 = arith.addi %0, %1 : i32
    %c0_i32 = arith.constant 0 : i32
    %c0_i32_0 = arith.constant 0 : i32
    %3 = arith.addi %c0_i32_0, %c0_i32 : i32
    %4 = arith.addi %2, %3 : i32
    %5 = arith.index_cast %4 : i32 to index
    %6 = memref.load %arg2[%5] : memref<32xi32, #tpu.memory_space<smem>>
    %c0_i32_1 = arith.constant 0 : i32
    %c0_i32_2 = arith.constant 0 : i32
    %7 = tpu.memref_slice %arg3[%6, %c0_i32_2] : memref<50x32xf32, #tpu.memory_space<any>> -> memref<1x32xf32, #tpu.memory_space<any>>
    %c0_i32_3 = arith.constant 0 : i32
    %8 = tpu.memref_slice %arg8[%3, %c0_i32_3] : memref<8x32xf32, #tpu.memory_space<vmem>> -> memref<1x32xf32, #tpu.memory_space<vmem>>
    %9 = tpu.memref_slice %arg9[%c0_i32_1] : memref<1x!tpu.dma_semaphore, #tpu.memory_space<semaphore_mem>> -> memref<1x!tpu.dma_semaphore, #tpu.memory_space<semaphore_mem>>
    %10 = tpu.memref_squeeze %9 : memref<1x!tpu.dma_semaphore, #tpu.memory_space<semaphore_mem>> -> memref<!tpu.dma_semaphore, #tpu.memory_space<semaphore_mem>>
    tpu.enqueue_dma source(%7 : memref<1x32xf32, #tpu.memory_space<any>>) target(%8 : memref<1x32xf32, #tpu.memory_space<vmem>>) target_semaphore(%10 : memref<!tpu.dma_semaphore, #tpu.memory_space<semaphore_mem>>)
    %c1_i32 = arith.constant 1 : i32
    %c0_i32_4 = arith.constant 0 : i32
    %11 = arith.addi %c0_i32_4, %c1_i32 : i32
    %12 = arith.addi %2, %11 : i32
    %13 = arith.index_cast %12 : i32 to index
    %14 = memref.load %arg2[%13] : memref<32xi32, #tpu.memory_space<smem>>
    %c0_i32_5 = arith.constant 0 : i32
    %c0_i32_6 = arith.constant 0 : i32
    %15 = tpu.memref_slice %arg3[%14, %c0_i32_6] : memref<50x32xf32, #tpu.memory_space<any>> -> memref<1x32xf32, #tpu.memory_space<any>>
    %c0_i32_7 = arith.constant 0 : i32
    %16 = tpu.memref_slice %arg8[%11, %c0_i32_7] : memref<8x32xf32, #tpu.memory_space<vmem>> -> memref<1x32xf32, #tpu.memory_space<vmem>>
    %17 = tpu.memref_slice %arg9[%c0_i32_5] : memref<1x!tpu.dma_semaphore, #tpu.memory_space<semaphore_mem>> -> memref<1x!tpu.dma_semaphore, #tpu.memory_space<semaphore_mem>>
    %18 = tpu.memref_squeeze %17 : memref<1x!tpu.dma_semaphore, #tpu.memory_space<semaphore_mem>> -> memref<!tpu.dma_semaphore, #tpu.memory_space<semaphore_mem>>
    tpu.enqueue_dma source(%15 : memref<1x32xf32, #tpu.memory_space<any>>) target(%16 : memref<1x32xf32, #tpu.memory_space<vmem>>) target_semaphore(%18 : memref<!tpu.dma_semaphore, #tpu.memory_space<semaphore_mem>>)
    %c2_i32 = arith.constant 2 : i32
    %c0_i32_8 = arith.constant 0 : i32
    %19 = arith.addi %c0_i32_8, %c2_i32 : i32
    %20 = arith.addi %2, %19 : i32
    %21 = arith.index_cast %20 : i32 to index
    %22 = memref.load %arg2[%21] : memref<32xi32, #tpu.memory_space<smem>>
    %c0_i32_9 = arith.constant 0 : i32
    %c0_i32_10 = arith.constant 0 : i32
    %23 = tpu.memref_slice %arg3[%22, %c0_i32_10] : memref<50x32xf32, #tpu.memory_space<any>> -> memref<1x32xf32, #tpu.memory_space<any>>
    %c0_i32_11 = arith.constant 0 : i32
    %24 = tpu.memref_slice %arg8[%19, %c0_i32_11] : memref<8x32xf32, #tpu.memory_space<vmem>> -> memref<1x32xf32, #tpu.memory_space<vmem>>
    %25 = tpu.memref_slice %arg9[%c0_i32_9] : memref<1x!tpu.dma_semaphore, #tpu.memory_space<semaphore_mem>> -> memref<1x!tpu.dma_semaphore, #tpu.memory_space<semaphore_mem>>
    %26 = tpu.memref_squeeze %25 : memref<1x!tpu.dma_semaphore, #tpu.memory_space<semaphore_mem>> -> memref<!tpu.dma_semaphore, #tpu.memory_space<semaphore_mem>>
    tpu.enqueue_dma source(%23 : memref<1x32xf32, #tpu.memory_space<any>>) target(%24 : memref<1x32xf32, #tpu.memory_space<vmem>>) target_semaphore(%26 : memref<!tpu.dma_semaphore, #tpu.memory_space<semaphore_mem>>)
    %c3_i32 = arith.constant 3 : i32
    %c0_i32_12 = arith.constant 0 : i32
    %27 = arith.addi %c0_i32_12, %c3_i32 : i32
    %28 = arith.addi %2, %27 : i32
    %29 = arith.index_cast %28 : i32 to index
    %30 = memref.load %arg2[%29] : memref<32xi32, #tpu.memory_space<smem>>
    %c0_i32_13 = arith.constant 0 : i32
    %c0_i32_14 = arith.constant 0 : i32
    %31 = tpu.memref_slice %arg3[%30, %c0_i32_14] : memref<50x32xf32, #tpu.memory_space<any>> -> memref<1x32xf32, #tpu.memory_space<any>>
    %c0_i32_15 = arith.constant 0 : i32
    %32 = tpu.memref_slice %arg8[%27, %c0_i32_15] : memref<8x32xf32, #tpu.memory_space<vmem>> -> memref<1x32xf32, #tpu.memory_space<vmem>>
    %33 = tpu.memref_slice %arg9[%c0_i32_13] : memref<1x!tpu.dma_semaphore, #tpu.memory_space<semaphore_mem>> -> memref<1x!tpu.dma_semaphore, #tpu.memory_space<semaphore_mem>>
    %34 = tpu.memref_squeeze %33 : memref<1x!tpu.dma_semaphore, #tpu.memory_space<semaphore_mem>> -> memref<!tpu.dma_semaphore, #tpu.memory_space<semaphore_mem>>
    tpu.enqueue_dma source(%31 : memref<1x32xf32, #tpu.memory_space<any>>) target(%32 : memref<1x32xf32, #tpu.memory_space<vmem>>) target_semaphore(%34 : memref<!tpu.dma_semaphore, #tpu.memory_space<semaphore_mem>>)
    %c4_i32 = arith.constant 4 : i32
    %c0_i32_16 = arith.constant 0 : i32
    %35 = arith.addi %c0_i32_16, %c4_i32 : i32
    %36 = arith.addi %2, %35 : i32
    %37 = arith.index_cast %36 : i32 to index
    %38 = memref.load %arg2[%37] : memref<32xi32, #tpu.memory_space<smem>>
    %c0_i32_17 = arith.constant 0 : i32
    %c0_i32_18 = arith.constant 0 : i32
    %39 = tpu.memref_slice %arg3[%38, %c0_i32_18] : memref<50x32xf32, #tpu.memory_space<any>> -> memref<1x32xf32, #tpu.memory_space<any>>
    %c0_i32_19 = arith.constant 0 : i32
    %40 = tpu.memref_slice %arg8[%35, %c0_i32_19] : memref<8x32xf32, #tpu.memory_space<vmem>> -> memref<1x32xf32, #tpu.memory_space<vmem>>
    %41 = tpu.memref_slice %arg9[%c0_i32_17] : memref<1x!tpu.dma_semaphore, #tpu.memory_space<semaphore_mem>> -> memref<1x!tpu.dma_semaphore, #tpu.memory_space<semaphore_mem>>
    %42 = tpu.memref_squeeze %41 : memref<1x!tpu.dma_semaphore, #tpu.memory_space<semaphore_mem>> -> memref<!tpu.dma_semaphore, #tpu.memory_space<semaphore_mem>>
    tpu.enqueue_dma source(%39 : memref<1x32xf32, #tpu.memory_space<any>>) target(%40 : memref<1x32xf32, #tpu.memory_space<vmem>>) target_semaphore(%42 : memref<!tpu.dma_semaphore, #tpu.memory_space<semaphore_mem>>)
    %c5_i32 = arith.constant 5 : i32
    %c0_i32_20 = arith.constant 0 : i32
    %43 = arith.addi %c0_i32_20, %c5_i32 : i32
    %44 = arith.addi %2, %43 : i32
    %45 = arith.index_cast %44 : i32 to index
    %46 = memref.load %arg2[%45] : memref<32xi32, #tpu.memory_space<smem>>
    %c0_i32_21 = arith.constant 0 : i32
    %c0_i32_22 = arith.constant 0 : i32
    %47 = tpu.memref_slice %arg3[%46, %c0_i32_22] : memref<50x32xf32, #tpu.memory_space<any>> -> memref<1x32xf32, #tpu.memory_space<any>>
    %c0_i32_23 = arith.constant 0 : i32
    %48 = tpu.memref_slice %arg8[%43, %c0_i32_23] : memref<8x32xf32, #tpu.memory_space<vmem>> -> memref<1x32xf32, #tpu.memory_space<vmem>>
    %49 = tpu.memref_slice %arg9[%c0_i32_21] : memref<1x!tpu.dma_semaphore, #tpu.memory_space<semaphore_mem>> -> memref<1x!tpu.dma_semaphore, #tpu.memory_space<semaphore_mem>>
    %50 = tpu.memref_squeeze %49 : memref<1x!tpu.dma_semaphore, #tpu.memory_space<semaphore_mem>> -> memref<!tpu.dma_semaphore, #tpu.memory_space<semaphore_mem>>
    tpu.enqueue_dma source(%47 : memref<1x32xf32, #tpu.memory_space<any>>) target(%48 : memref<1x32xf32, #tpu.memory_space<vmem>>) target_semaphore(%50 : memref<!tpu.dma_semaphore, #tpu.memory_space<semaphore_mem>>)
    %c6_i32 = arith.constant 6 : i32
    %c0_i32_24 = arith.constant 0 : i32
    %51 = arith.addi %c0_i32_24, %c6_i32 : i32
    %52 = arith.addi %2, %51 : i32
    %53 = arith.index_cast %52 : i32 to index
    %54 = memref.load %arg2[%53] : memref<32xi32, #tpu.memory_space<smem>>
    %c0_i32_25 = arith.constant 0 : i32
    %c0_i32_26 = arith.constant 0 : i32
    %55 = tpu.memref_slice %arg3[%54, %c0_i32_26] : memref<50x32xf32, #tpu.memory_space<any>> -> memref<1x32xf32, #tpu.memory_space<any>>
    %c0_i32_27 = arith.constant 0 : i32
    %56 = tpu.memref_slice %arg8[%51, %c0_i32_27] : memref<8x32xf32, #tpu.memory_space<vmem>> -> memref<1x32xf32, #tpu.memory_space<vmem>>
    %57 = tpu.memref_slice %arg9[%c0_i32_25] : memref<1x!tpu.dma_semaphore, #tpu.memory_space<semaphore_mem>> -> memref<1x!tpu.dma_semaphore, #tpu.memory_space<semaphore_mem>>
    %58 = tpu.memref_squeeze %57 : memref<1x!tpu.dma_semaphore, #tpu.memory_space<semaphore_mem>> -> memref<!tpu.dma_semaphore, #tpu.memory_space<semaphore_mem>>
    tpu.enqueue_dma source(%55 : memref<1x32xf32, #tpu.memory_space<any>>) target(%56 : memref<1x32xf32, #tpu.memory_space<vmem>>) target_semaphore(%58 : memref<!tpu.dma_semaphore, #tpu.memory_space<semaphore_mem>>)
    %c7_i32 = arith.constant 7 : i32
    %c0_i32_28 = arith.constant 0 : i32
    %59 = arith.addi %c0_i32_28, %c7_i32 : i32
    %60 = arith.addi %2, %59 : i32
    %61 = arith.index_cast %60 : i32 to index
    %62 = memref.load %arg2[%61] : memref<32xi32, #tpu.memory_space<smem>>
    %c0_i32_29 = arith.constant 0 : i32
    %c0_i32_30 = arith.constant 0 : i32
    %63 = tpu.memref_slice %arg3[%62, %c0_i32_30] : memref<50x32xf32, #tpu.memory_space<any>> -> memref<1x32xf32, #tpu.memory_space<any>>
    %c0_i32_31 = arith.constant 0 : i32
    %64 = tpu.memref_slice %arg8[%59, %c0_i32_31] : memref<8x32xf32, #tpu.memory_space<vmem>> -> memref<1x32xf32, #tpu.memory_space<vmem>>
    %65 = tpu.memref_slice %arg9[%c0_i32_29] : memref<1x!tpu.dma_semaphore, #tpu.memory_space<semaphore_mem>> -> memref<1x!tpu.dma_semaphore, #tpu.memory_space<semaphore_mem>>
    %66 = tpu.memref_squeeze %65 : memref<1x!tpu.dma_semaphore, #tpu.memory_space<semaphore_mem>> -> memref<!tpu.dma_semaphore, #tpu.memory_space<semaphore_mem>>
    tpu.enqueue_dma source(%63 : memref<1x32xf32, #tpu.memory_space<any>>) target(%64 : memref<1x32xf32, #tpu.memory_space<vmem>>) target_semaphore(%66 : memref<!tpu.dma_semaphore, #tpu.memory_space<semaphore_mem>>)
    %c8_i32_32 = arith.constant 8 : i32
    %c0 = arith.constant 0 : index
    %c0_33 = arith.constant 0 : index
    %67 = vector.load %arg5[%c0, %c0_33] : memref<1x32xf32, #tpu.memory_space<vmem>>, vector<1x32xf32>
    %c0_34 = arith.constant 0 : index
    %c0_35 = arith.constant 0 : index
    %68 = vector.load %arg6[%c0_34, %c0_35] : memref<1x32xf32, #tpu.memory_space<vmem>>, vector<1x32xf32>
    %c0_i32_36 = arith.constant 0 : i32
    %c0_i32_37 = arith.constant 0 : i32
    %c0_i32_38 = arith.constant 0 : i32
    %69 = tpu.memref_slice %arg8[%c0_i32_37, %c0_i32_38] : memref<8x32xf32, #tpu.memory_space<vmem>> -> memref<8x32xf32, #tpu.memory_space<vmem>>
    %c0_i32_39 = arith.constant 0 : i32
    %c0_i32_40 = arith.constant 0 : i32
    %70 = tpu.memref_slice %arg8[%c0_i32_39, %c0_i32_40] : memref<8x32xf32, #tpu.memory_space<vmem>> -> memref<8x32xf32, #tpu.memory_space<vmem>>
    %71 = tpu.memref_slice %arg9[%c0_i32_36] : memref<1x!tpu.dma_semaphore, #tpu.memory_space<semaphore_mem>> -> memref<1x!tpu.dma_semaphore, #tpu.memory_space<semaphore_mem>>
    %72 = tpu.memref_squeeze %71 : memref<1x!tpu.dma_semaphore, #tpu.memory_space<semaphore_mem>> -> memref<!tpu.dma_semaphore, #tpu.memory_space<semaphore_mem>>
    tpu.wait_dma2 semaphore(%72 : memref<!tpu.dma_semaphore, #tpu.memory_space<semaphore_mem>>) src(%69 : memref<8x32xf32, #tpu.memory_space<vmem>>) dst(%70 : memref<8x32xf32, #tpu.memory_space<vmem>>)
    %c0_41 = arith.constant 0 : index
    %c0_42 = arith.constant 0 : index
    %73 = vector.load %arg8[%c0_41, %c0_42] : memref<8x32xf32, #tpu.memory_space<vmem>>, vector<8x32xf32>
    %c0_43 = arith.constant 0 : index
    %c0_44 = arith.constant 0 : index
    %74 = vector.load %arg4[%c0_43, %c0_44] : memref<8x32xf32, #tpu.memory_space<vmem>>, vector<8x32xf32>
    %75 = arith.addf %73, %74 : vector<8x32xf32>
    %cst = arith.constant dense<0.000000e+00> : vector<8xf32>
    %76 = vector.multi_reduction <add>, %75, %cst [1] : vector<8x32xf32> to vector<8xf32>
    %77 = vector.shape_cast %76 : vector<8xf32> to vector<8x1xf32>
    %cst_45 = arith.constant 3.200000e+01 : f32
    %78 = vector.broadcast %cst_45 : f32 to vector<8x1xf32>
    %79 = arith.divf %77, %78 : vector<8x1xf32>
    %80 = vector.broadcast %79 : vector<8x1xf32> to vector<8x32xf32>
    %81 = arith.subf %75, %80 : vector<8x32xf32>
    %82 = arith.mulf %81, %81 : vector<8x32xf32>
    %cst_46 = arith.constant dense<0.000000e+00> : vector<8xf32>
    %83 = vector.multi_reduction <add>, %82, %cst_46 [1] : vector<8x32xf32> to vector<8xf32>
    %84 = vector.shape_cast %83 : vector<8xf32> to vector<8x1xf32>
    %cst_47 = arith.constant 3.200000e+01 : f32
    %85 = vector.broadcast %cst_47 : f32 to vector<8x1xf32>
    %86 = arith.divf %84, %85 : vector<8x1xf32>
    %cst_48 = arith.constant 9.99999996E-13 : f32
    %87 = vector.broadcast %cst_48 : f32 to vector<8x1xf32>
    %88 = arith.addf %86, %87 : vector<8x1xf32>
    %89 = math.rsqrt %88 : vector<8x1xf32>
    %90 = vector.broadcast %89 : vector<8x1xf32> to vector<8x32xf32>
    %91 = arith.mulf %81, %90 : vector<8x32xf32>
    %92 = vector.broadcast %67 : vector<1x32xf32> to vector<8x32xf32>
    %93 = arith.mulf %91, %92 : vector<8x32xf32>
    %94 = vector.broadcast %68 : vector<1x32xf32> to vector<8x32xf32>
    %95 = arith.addf %93, %94 : vector<8x32xf32>
    %c0_49 = arith.constant 0 : index
    %c0_50 = arith.constant 0 : index
    %c0_51 = arith.constant 0 : index
    %96 = vector.load %arg7[%c0_49, %c0_50, %c0_51] : memref<1x8x32xf32, #tpu.memory_space<vmem>>, vector<1x8x32xf32>
    %97 = vector.shape_cast %96 : vector<1x8x32xf32> to vector<8x32xf32>
    %98 = vector.shape_cast %95 : vector<8x32xf32> to vector<1x8x32xf32>
    tpu.vector_store %arg7[%c0_49, %c0_50, %c0_51], %98 {strides = array<i32>} : memref<1x8x32xf32, #tpu.memory_space<vmem>>, vector<1x8x32xf32>,
    return
  }
  func.func @transform_1(%arg0: i32, %arg1: i32, %arg2: memref<32xi32, #tpu.memory_space<smem>>) -> (i32, i32) {
    %c0_i32 = arith.constant 0 : i32
    %c0_i32_0 = arith.constant 0 : i32
    return %arg0, %c0_i32 : i32, i32
  }
  func.func @transform_2(%arg0: i32, %arg1: i32, %arg2: memref<32xi32, #tpu.memory_space<smem>>) -> (i32, i32) {
    %c0_i32 = arith.constant 0 : i32
    %c0_i32_0 = arith.constant 0 : i32
    %c0_i32_1 = arith.constant 0 : i32
    return %c0_i32, %c0_i32_0 : i32, i32
  }
  func.func @transform_3(%arg0: i32, %arg1: i32, %arg2: memref<32xi32, #tpu.memory_space<smem>>) -> (i32, i32) {
    %c0_i32 = arith.constant 0 : i32
    %c0_i32_0 = arith.constant 0 : i32
    %c0_i32_1 = arith.constant 0 : i32
    return %c0_i32, %c0_i32_0 : i32, i32
  }
  func.func @transform_4(%arg0: i32, %arg1: i32, %arg2: memref<32xi32, #tpu.memory_space<smem>>) -> (i32, i32, i32) {
    %c0_i32 = arith.constant 0 : i32
    %c0_i32_0 = arith.constant 0 : i32
    return %arg1, %arg0, %c0_i32 : i32, i32, i32
  }
}

</mosaic_0001>

<llo_original>
// kernel: tpu_custom_call.1
$region0: #{tpu_custom_call.1}
  #allocation0 [shape = 'u32[]', space=smem, size = 0x4, offset = 0x4, fixed_abs, tag = 'smem constant byte address 0x4 - core index']
  #allocation1 [shape = 'u32[72,128]{1,0:T(1,128)}', space=vmem, size = 0x9000, scoped, tag = 'internal scratch']
  #allocation2 [shape = 'f32[8,32]{1,0:T(8,128)}', space=vmem, size = 0x1000, scoped, tag = 'scratch operand']
  #allocation3 [shape = 's32[1]{0}', space=sflag, size = 0x4, scoped, tag = 'scratch operand']
  #allocation4 [shape = 's32[1]{0}', space=sflag, size = 0x4, scoped, tag = 'scoped memory for tpu_custom_call.1']
  #allocation5 [shape = 'u8[512]{0}', space=smem, size = 0x200, scoped, tag = 'prefetched SMEM operand 0']
  #allocation8 [shape = 's32[]', space=sflag, size = 0x4, offset = 0, fixed_abs, tag = 'sflag constant byte address 0x0 - dummy sync flag']
  #allocation9 [shape = 's32[]', space=sflag, size = 0x4, offset = 0, fixed_abs, tag = 'sflag constant byte address 0x0 - dummy sync flag']
  #allocation10 [shape = 's32[]', space=sflag, size = 0x4, offset = 0, fixed_abs, tag = 'sflag constant byte address 0x0 - dummy sync flag']
  #allocation11 [shape = 's32[]', space=sflag, size = 0x4, offset = 0, fixed_abs, tag = 'sflag constant byte address 0x0 - dummy sync flag']
  #allocation12 [shape = 's32[]', space=sflag, size = 0x4, offset = 0, fixed_abs, tag = 'sflag constant byte address 0x0 - dummy sync flag']
  #allocation13 [shape = 's32[]', space=sflag, size = 0x4, offset = 0, fixed_abs, tag = 'sflag constant byte address 0x0 - dummy sync flag']
  #allocation14 [shape = 's32[]', space=sflag, size = 0x4, offset = 0, fixed_abs, tag = 'sflag constant byte address 0x0 - dummy sync flag']
  #allocation15 [shape = 's32[]', space=sflag, size = 0x4, offset = 0, fixed_abs, tag = 'sflag constant byte address 0x0 - dummy sync flag']
  %s0 = inlined_call_operand.vmem [shape: s32[32], index: 0, kind: input, shape index: {}]
  %s1 = inlined_call_operand.vmem [shape: f32[50,32], index: 1, kind: input, shape index: {}]
  %s2 = inlined_call_operand.vmem [shape: f32[16,32], index: 2, kind: input, shape index: {}]
  %s3 = inlined_call_operand.vmem [shape: f32[1,32], index: 3, kind: input, shape index: {}]
  %s4 = inlined_call_operand.vmem [shape: f32[1,32], index: 4, kind: input, shape index: {}]
  %s5 = inlined_call_operand.hbm [shape: f32[2,16,32], index: 5, kind: output, shape index: {}]
  %s6 = sld [smem:[#allocation0]]
  $region285: #{tpu_custom_call.1} parent=0
    _
  %s8 = ssub.s32 1, %s6
  %s9 = scalar_select 0, %s8, %s6
  %s11 = sshll.u32 %s0, 4
  %s12 = int_to_ptr.vmem [resolvable:$true] %s11
  %14 = dma.vmem_to_smem %s12, 16, [#allocation5], [#allocation4]
  %16 = dma.done [#allocation4], 16
  %17 = sfence
  $region1: #{tpu_custom_call.1} parent=0
    #allocation6 [shape = 'u8[8192]{0}', space=vmem, size = 0x2000, scoped, tag = 'output window, operand 0']
    #allocation7 [shape = 's32[2]{0}', space=sflag, size = 0x8, scoped, tag = 'scoped memory for tpu_custom_call.1']
    %18 = vsyncpa [#allocation7], 0
    %s19 = scalar_lea.sflag [#allocation7], 1
    %20 = vsyncpa %s19, 0
    loop: start=0, step=1, limit=6
    $region2: #{tpu_custom_call.1} parent=1 // loop_pre_header
      _
    $region3: #{tpu_custom_call.1} parent=1 // loop_header
      %s22 = sphi 0, %s26
      %p23 = scmp.ge.s32.totalorder %s22, 6
      %s29 = sphi 0, %s41
      %s30 = sphi 0, %s37
      %s31 = sphi 0, %s29
      %s32 = sphi 0, %s30
      %s33 = sphi 0, %s31
      %s34 = sphi 0, %s32
      %s44 = sphi 0, %s46
      %s47 = sphi 0, %s44
      %s48 = sphi 0, %s47
      %s64 = sphi 0, %s48
      %s68 = sphi 0, %s68
      %s70 = sphi 0, %s68
      %s71 = sphi 0, %s70
      %s85 = sphi 0, %s71
      %s89 = sphi 0, %s89
      %s91 = sphi 0, %s89
      %s92 = sphi 0, %s91
      %s106 = sphi 0, %s92
      %s114 = sphi 0, %s116
      %s117 = sphi 0, %s114
      %s118 = sphi 0, %s117
      %s134 = sphi 0, %s118
    $region4: #{tpu_custom_call.1} parent=1 // loop_header_branch
      %25 = sbr.rel (%p23) target = $region8
    $region5: #{tpu_custom_call.1} parent=1 // loop_body
      %s27 = ssub.s32 %s22, 1
      %s28 = ssub.s32 %s22, 2
      %s35 = sadd.s32 1, %s30
      %p36 = scmp.ge.s32.totalorder %s35, 2
      %s37 = scalar_select %p36, 0, %s35
      %s38 = sadd.s32 1, %s29
      %s39 = scalar_select %p36, %s38, %s29
      %p40 = scmp.ge.s32.totalorder %s39, 2
      %s41 = scalar_select %p40, 0, %s39
      %s42 = ssub.s32 %s29, %s41
      %p43 = scmp.eq.s32.totalorder %s42, 0
      %s45 = sadd.s32 %s44, 1
      %s46 = scalar_select %p43, %s44, %s45
      %p49 = pneg %p43
      %p50 = scmp.eq.s32.totalorder %s22, 3
      %p51 = por %p49, %p50
      %p52 = scmp.ne.s32.totalorder %s44, %s47
      %p53 = scmp.eq.s32.totalorder %s22, 0
      %p54 = por %p52, %p53
      %p55 = scmp.ne.s32.totalorder %s44, %s47
      %p56 = scmp.eq.s32.totalorder %s27, 3
      %p57 = por %p55, %p56
      %p58 = scmp.ne.s32.totalorder %s47, %s48
      %p59 = scmp.eq.s32.totalorder %s27, 0
      %p60 = por %p58, %p59
      %p61 = scmp.ne.s32.totalorder %s47, %s48
      %p62 = scmp.eq.s32.totalorder %s28, 3
      %p63 = por %p61, %p62
      %p65 = scmp.ne.s32.totalorder %s48, %s64
      %p66 = scmp.eq.s32.totalorder %s28, 0
      %p67 = por %p65, %p66
      %s69 = sadd.s32 %s68, 1
      %p72 = scmp.eq.s32.totalorder %s22, 3
      %p73 = scmp.ne.s32.totalorder %s68, %s70
      %p74 = scmp.eq.s32.totalorder %s22, 0
      %p75 = por %p73, %p74
      %p76 = scmp.ne.s32.totalorder %s68, %s70
      %p77 = scmp.eq.s32.totalorder %s27, 3
      %p78 = por %p76, %p77
      %p79 = scmp.ne.s32.totalorder %s70, %s71
      %p80 = scmp.eq.s32.totalorder %s27, 0
      %p81 = por %p79, %p80
      %p82 = scmp.ne.s32.totalorder %s70, %s71
      %p83 = scmp.eq.s32.totalorder %s28, 3
      %p84 = por %p82, %p83
      %p86 = scmp.ne.s32.totalorder %s71, %s85
      %p87 = scmp.eq.s32.totalorder %s28, 0
      %p88 = por %p86, %p87
      %s90 = sadd.s32 %s89, 1
      %p93 = scmp.eq.s32.totalorder %s22, 3
      %p94 = scmp.ne.s32.totalorder %s89, %s91
      %p95 = scmp.eq.s32.totalorder %s22, 0
      %p96 = por %p94, %p95
      %p97 = scmp.ne.s32.totalorder %s89, %s91
      %p98 = scmp.eq.s32.totalorder %s27, 3
      %p99 = por %p97, %p98
      %p100 = scmp.ne.s32.totalorder %s91, %s92
      %p101 = scmp.eq.s32.totalorder %s27, 0
      %p102 = por %p100, %p101
      %p103 = scmp.ne.s32.totalorder %s91, %s92
      %p104 = scmp.eq.s32.totalorder %s28, 3
      %p105 = por %p103, %p104
      %p107 = scmp.ne.s32.totalorder %s92, %s106
      %p108 = scmp.eq.s32.totalorder %s28, 0
      %p109 = por %p107, %p108
      %s110 = ssub.s32 %s30, %s37
      %s111 = ssub.s32 %s29, %s41
      %s112 = sor.u32 %s110, %s111
      %p113 = scmp.eq.s32.totalorder %s112, 0
      %s115 = sadd.s32 %s114, 1
      %s116 = scalar_select %p113, %s114, %s115
      %p119 = pneg %p113
      %p120 = scmp.eq.s32.totalorder %s22, 3
      %p121 = por %p119, %p120
      %p122 = scmp.ne.s32.totalorder %s114, %s117
      %p123 = scmp.eq.s32.totalorder %s22, 0
      %p124 = por %p122, %p123
      %p125 = scmp.ne.s32.totalorder %s114, %s117
      %p126 = scmp.eq.s32.totalorder %s27, 3
      %p127 = por %p125, %p126
      %p128 = scmp.ne.s32.totalorder %s117, %s118
      %p129 = scmp.eq.s32.totalorder %s27, 0
      %p130 = por %p128, %p129
      %p131 = scmp.ne.s32.totalorder %s117, %s118
      %p132 = scmp.eq.s32.totalorder %s28, 3
      %p133 = por %p131, %p132
      %p135 = scmp.ne.s32.totalorder %s118, %s134
      %p136 = scmp.eq.s32.totalorder %s28, 0
      %p137 = por %p135, %p136
      %p138 = scmp.le.s32.totalorder 1, %s22
      %p139 = scmp.lt.s32.totalorder %s22, 5
      %p140 = pnand %p138, %p139
      %p141 = pneg %p140
      // Predicated region
      $region9: #{tpu_custom_call.1} parent=5 // pred_check
        _
      $region10: #{tpu_custom_call.1} parent=5 // pred_check_branch
        %143 = sbr.rel (%p140) target = $region12
      $region11: #{tpu_custom_call.1} parent=5 // pred_region
        %s144 = ssub.s32 %s22, 1
        // Predicated region
        $region13: #{tpu_custom_call.1} parent=11 // pred_check
          %p145 = pneg %p81
        $region14: #{tpu_custom_call.1} parent=11 // pred_check_branch
          %147 = sbr.rel (%p145) target = $region16
        $region15: #{tpu_custom_call.1} parent=11 // pred_region
          _
        $region16: #{tpu_custom_call.1} parent=11 // pred_fallthru
          _
        // Predicated region
        $region17: #{tpu_custom_call.1} parent=11 // pred_check
          %p148 = pneg %p102
        $region18: #{tpu_custom_call.1} parent=11 // pred_check_branch
          %150 = sbr.rel (%p148) target = $region20
        $region19: #{tpu_custom_call.1} parent=11 // pred_region
          _
        $region20: #{tpu_custom_call.1} parent=11 // pred_fallthru
          _
      $region12: #{tpu_custom_call.1} parent=5 // pred_fallthru
        _
      %p151 = scmp.lt.s32.totalorder %s22, 4
      // Predicated region
      $region21: #{tpu_custom_call.1} parent=5 // pred_check
        %p152 = pneg %p151
      $region22: #{tpu_custom_call.1} parent=5 // pred_check_branch
        %154 = sbr.rel (%p152) target = $region24
      $region23: #{tpu_custom_call.1} parent=5 // pred_region
        // Predicated region
        $region25: #{tpu_custom_call.1} parent=23 // pred_check
          %p155 = pneg %p54
        $region26: #{tpu_custom_call.1} parent=23 // pred_check_branch
          %157 = sbr.rel (%p155) target = $region28
        $region27: #{tpu_custom_call.1} parent=23 // pred_region
          %p158 = scmp.lt.s32.totalorder %s29, 1
          %s159 = scalar_select %p158, %s29, 1
          %s160 = smul.addr %s159, 8
          %s161 = scalar_lea.vmem %s2, %s160
        $region28: #{tpu_custom_call.1} parent=23 // pred_fallthru
          _
      $region24: #{tpu_custom_call.1} parent=5 // pred_fallthru
        _
      %p162 = scmp.le.s32.totalorder 1, %s22
      %p163 = scmp.lt.s32.totalorder %s22, 5
      %p164 = pnand %p162, %p163
      %p165 = pneg %p164
      // Predicated region
      $region29: #{tpu_custom_call.1} parent=5 // pred_check
        _
      $region30: #{tpu_custom_call.1} parent=5 // pred_check_branch
        %167 = sbr.rel (%p164) target = $region32
      $region31: #{tpu_custom_call.1} parent=5 // pred_region
        %s168 = ssub.s32 %s22, 1
        %p169 = scmp.lt.s32.totalorder %s31, 1
        %s170 = scalar_select %p169, %s31, 1
        %s171 = smul.addr %s170, 8
        %s172 = scalar_lea.vmem %s2, %s171
        %p173 = pneg %p60
        %p174 = pneg %p57
        %p175 = pneg %p81
        %p176 = pneg %p78
        %p177 = pneg %p102
        %p178 = pneg %p99
        %p179 = pneg %p130
        %p180 = pneg %p127
        %s181 = sand.u32 %s117, 1
        %s182 = scalar_lea.sflag [#allocation7], %s181
        %s183 = sand.u32 %s117, 1
        %s184 = smul.addr %s183, 8
        %s185 = scalar_lea.vmem [#allocation6], %s184
        %p186 = scmp.lt.s32.totalorder %s31, 1
        %s187 = scalar_select %p186, %s31, 1
        %s188 = smul.addr %s187, 8
        %s189 = scalar_lea.vmem %s2, %s188
        %s190 = smul.u32 %s32, 16
        %s191 = smul.u32 %s31, 8
        %s192 = sadd.s32 %s190, %s191
        %s193 = sld [smem:[#allocation5 + %s192]]
        %s194 = scalar_lea.vmem %s1, %s193
        // Predicated region
        $region33: #{tpu_custom_call.1} parent=31 // pred_check
          _
        $region34: #{tpu_custom_call.1} parent=31 // pred_check_branch
          %196 = sbr.rel target = $region36
        $region35: #{tpu_custom_call.1} parent=31 // pred_region
          // Predicated region
          $region48: #{tpu_custom_call.1} parent=35 // pred_check
            _
          $region49: #{tpu_custom_call.1} parent=35 // pred_check_branch
            %212 = sbr.rel (0) target = $region51
          $region50: #{tpu_custom_call.1} parent=35 // pred_region
            %s214 = ssub.s32 2, 1
            loop: start=0, step=1, limit=1
            $region52: #{tpu_custom_call.1} parent=50 // loop_pre_header
              _
            $region53: #{tpu_custom_call.1} parent=50 // loop_header
              %s216 = sphi 0, %s220
              %p217 = scmp.ge.s32.totalorder %s216, 1
              %s221 = sphi %s194, %s194
              %s222 = sphi [#allocation2], [#allocation2]
            $region54: #{tpu_custom_call.1} parent=50 // loop_header_branch
              %219 = sbr.rel (%p217) target = $region58
            $region55: #{tpu_custom_call.1} parent=50 // loop_body
              %v223 = vld [vmem:[%s221] sm:%s214]
              %224 = vst [vmem:[%s222] sm:%s214] %v223
            $region56: #{tpu_custom_call.1} parent=50 // loop_footer
              %s220 = sadd.s32 1, %s216
            $region57: #{tpu_custom_call.1} parent=50 // loop_footer_branch
              %215 = sbr.rel target = $region53
            $region58: #{tpu_custom_call.1} parent=50 // loop_exit
              _
          $region51: #{tpu_custom_call.1} parent=35 // pred_fallthru
            _
        $region36: #{tpu_custom_call.1} parent=31 // pred_fallthru
          _
        // Predicated region
        $region37: #{tpu_custom_call.1} parent=31 // pred_check
          _
        $region38: #{tpu_custom_call.1} parent=31 // pred_check_branch
          %198 = sbr.rel (0) target = $region40
        $region39: #{tpu_custom_call.1} parent=31 // pred_region
          %s200 = ssub.s32 2, 1
          loop: start=0, step=1, limit=1
          $region41: #{tpu_custom_call.1} parent=39 // loop_pre_header
            _
          $region42: #{tpu_custom_call.1} parent=39 // loop_header
            %s202 = sphi 0, %s206
            %p203 = scmp.ge.s32.totalorder %s202, 1
            %s207 = sphi %s194, %s194
            %s208 = sphi [#allocation2], [#allocation2]
          $region43: #{tpu_custom_call.1} parent=39 // loop_header_branch
            %205 = sbr.rel (%p203) target = $region47
          $region44: #{tpu_custom_call.1} parent=39 // loop_body
            %v209 = vld [vmem:[%s207] sm:%s200]
            %210 = vst [vmem:[%s208] sm:%s200] %v209
          $region45: #{tpu_custom_call.1} parent=39 // loop_footer
            %s206 = sadd.s32 1, %s202
          $region46: #{tpu_custom_call.1} parent=39 // loop_footer_branch
            %201 = sbr.rel target = $region42
          $region47: #{tpu_custom_call.1} parent=39 // loop_exit
            _
        $region40: #{tpu_custom_call.1} parent=31 // pred_fallthru
          _
        // Predicated region
        $region59: #{tpu_custom_call.1} parent=31 // pred_check
          _
        $region60: #{tpu_custom_call.1} parent=31 // pred_check_branch
          %227 = sbr.rel (0) target = $region62
        $region61: #{tpu_custom_call.1} parent=31 // pred_region
          %228 = vsyncadd [#allocation3], 16
        $region62: #{tpu_custom_call.1} parent=31 // pred_fallthru
          _
        %s229 = sadd.s32 %s192, 1
        %s230 = sld [smem:[#allocation5 + %s229]]
        %s231 = scalar_lea.vmem %s1, %s230
        %s232 = scalar_lea.vmem [#allocation2], 1
        // Predicated region
        $region63: #{tpu_custom_call.1} parent=31 // pred_check
          _
        $region64: #{tpu_custom_call.1} parent=31 // pred_check_branch
          %234 = sbr.rel target = $region66
        $region65: #{tpu_custom_call.1} parent=31 // pred_region
          // Predicated region
          $region78: #{tpu_custom_call.1} parent=65 // pred_check
            _
          $region79: #{tpu_custom_call.1} parent=65 // pred_check_branch
            %250 = sbr.rel (0) target = $region81
          $region80: #{tpu_custom_call.1} parent=65 // pred_region
            %s252 = ssub.s32 2, 1
            loop: start=0, step=1, limit=1
            $region82: #{tpu_custom_call.1} parent=80 // loop_pre_header
              _
            $region83: #{tpu_custom_call.1} parent=80 // loop_header
              %s254 = sphi 0, %s258
              %p255 = scmp.ge.s32.totalorder %s254, 1
              %s259 = sphi %s231, %s231
              %s260 = sphi %s232, %s232
            $region84: #{tpu_custom_call.1} parent=80 // loop_header_branch
              %257 = sbr.rel (%p255) target = $region88
            $region85: #{tpu_custom_call.1} parent=80 // loop_body
              %v261 = vld [vmem:[%s259] sm:%s252]
              %262 = vst [vmem:[%s260] sm:%s252] %v261
            $region86: #{tpu_custom_call.1} parent=80 // loop_footer
              %s258 = sadd.s32 1, %s254
            $region87: #{tpu_custom_call.1} parent=80 // loop_footer_branch
              %253 = sbr.rel target = $region83
            $region88: #{tpu_custom_call.1} parent=80 // loop_exit
              _
          $region81: #{tpu_custom_call.1} parent=65 // pred_fallthru
            _
        $region66: #{tpu_custom_call.1} parent=31 // pred_fallthru
          _
        // Predicated region
        $region67: #{tpu_custom_call.1} parent=31 // pred_check
          _
        $region68: #{tpu_custom_call.1} parent=31 // pred_check_branch
          %236 = sbr.rel (0) target = $region70
        $region69: #{tpu_custom_call.1} parent=31 // pred_region
          %s238 = ssub.s32 2, 1
          loop: start=0, step=1, limit=1
          $region71: #{tpu_custom_call.1} parent=69 // loop_pre_header
            _
          $region72: #{tpu_custom_call.1} parent=69 // loop_header
            %s240 = sphi 0, %s244
            %p241 = scmp.ge.s32.totalorder %s240, 1
            %s245 = sphi %s231, %s231
            %s246 = sphi %s232, %s232
          $region73: #{tpu_custom_call.1} parent=69 // loop_header_branch
            %243 = sbr.rel (%p241) target = $region77
          $region74: #{tpu_custom_call.1} parent=69 // loop_body
            %v247 = vld [vmem:[%s245] sm:%s238]
            %248 = vst [vmem:[%s246] sm:%s238] %v247
          $region75: #{tpu_custom_call.1} parent=69 // loop_footer
            %s244 = sadd.s32 1, %s240
          $region76: #{tpu_custom_call.1} parent=69 // loop_footer_branch
            %239 = sbr.rel target = $region72
          $region77: #{tpu_custom_call.1} parent=69 // loop_exit
            _
        $region70: #{tpu_custom_call.1} parent=31 // pred_fallthru
          _
        // Predicated region
        $region89: #{tpu_custom_call.1} parent=31 // pred_check
          _
        $region90: #{tpu_custom_call.1} parent=31 // pred_check_branch
          %265 = sbr.rel (0) target = $region92
        $region91: #{tpu_custom_call.1} parent=31 // pred_region
          %266 = vsyncadd [#allocation3], 16
        $region92: #{tpu_custom_call.1} parent=31 // pred_fallthru
          _
        %s267 = sadd.s32 %s192, 2
        %s268 = sld [smem:[#allocation5 + %s267]]
        %s269 = scalar_lea.vmem %s1, %s268
        %s270 = scalar_lea.vmem [#allocation2], 2
        // Predicated region
        $region93: #{tpu_custom_call.1} parent=31 // pred_check
          _
        $region94: #{tpu_custom_call.1} parent=31 // pred_check_branch
          %272 = sbr.rel target = $region96
        $region95: #{tpu_custom_call.1} parent=31 // pred_region
          // Predicated region
          $region108: #{tpu_custom_call.1} parent=95 // pred_check
            _
          $region109: #{tpu_custom_call.1} parent=95 // pred_check_branch
            %288 = sbr.rel (0) target = $region111
          $region110: #{tpu_custom_call.1} parent=95 // pred_region
            %s290 = ssub.s32 2, 1
            loop: start=0, step=1, limit=1
            $region112: #{tpu_custom_call.1} parent=110 // loop_pre_header
              _
            $region113: #{tpu_custom_call.1} parent=110 // loop_header
              %s292 = sphi 0, %s296
              %p293 = scmp.ge.s32.totalorder %s292, 1
              %s297 = sphi %s269, %s269
              %s298 = sphi %s270, %s270
            $region114: #{tpu_custom_call.1} parent=110 // loop_header_branch
              %295 = sbr.rel (%p293) target = $region118
            $region115: #{tpu_custom_call.1} parent=110 // loop_body
              %v299 = vld [vmem:[%s297] sm:%s290]
              %300 = vst [vmem:[%s298] sm:%s290] %v299
            $region116: #{tpu_custom_call.1} parent=110 // loop_footer
              %s296 = sadd.s32 1, %s292
            $region117: #{tpu_custom_call.1} parent=110 // loop_footer_branch
              %291 = sbr.rel target = $region113
            $region118: #{tpu_custom_call.1} parent=110 // loop_exit
              _
          $region111: #{tpu_custom_call.1} parent=95 // pred_fallthru
            _
        $region96: #{tpu_custom_call.1} parent=31 // pred_fallthru
          _
        // Predicated region
        $region97: #{tpu_custom_call.1} parent=31 // pred_check
          _
        $region98: #{tpu_custom_call.1} parent=31 // pred_check_branch
          %274 = sbr.rel (0) target = $region100
        $region99: #{tpu_custom_call.1} parent=31 // pred_region
          %s276 = ssub.s32 2, 1
          loop: start=0, step=1, limit=1
          $region101: #{tpu_custom_call.1} parent=99 // loop_pre_header
            _
          $region102: #{tpu_custom_call.1} parent=99 // loop_header
            %s278 = sphi 0, %s282
            %p279 = scmp.ge.s32.totalorder %s278, 1
            %s283 = sphi %s269, %s269
            %s284 = sphi %s270, %s270
          $region103: #{tpu_custom_call.1} parent=99 // loop_header_branch
            %281 = sbr.rel (%p279) target = $region107
          $region104: #{tpu_custom_call.1} parent=99 // loop_body
            %v285 = vld [vmem:[%s283] sm:%s276]
            %286 = vst [vmem:[%s284] sm:%s276] %v285
          $region105: #{tpu_custom_call.1} parent=99 // loop_footer
            %s282 = sadd.s32 1, %s278
          $region106: #{tpu_custom_call.1} parent=99 // loop_footer_branch
            %277 = sbr.rel target = $region102
          $region107: #{tpu_custom_call.1} parent=99 // loop_exit
            _
        $region100: #{tpu_custom_call.1} parent=31 // pred_fallthru
          _
        // Predicated region
        $region119: #{tpu_custom_call.1} parent=31 // pred_check
          _
        $region120: #{tpu_custom_call.1} parent=31 // pred_check_branch
          %303 = sbr.rel (0) target = $region122
        $region121: #{tpu_custom_call.1} parent=31 // pred_region
          %304 = vsyncadd [#allocation3], 16
        $region122: #{tpu_custom_call.1} parent=31 // pred_fallthru
          _
        %s305 = sadd.s32 %s192, 3
        %s306 = sld [smem:[#allocation5 + %s305]]
        %s307 = scalar_lea.vmem %s1, %s306
        %s308 = scalar_lea.vmem [#allocation2], 3
        // Predicated region
        $region123: #{tpu_custom_call.1} parent=31 // pred_check
          _
        $region124: #{tpu_custom_call.1} parent=31 // pred_check_branch
          %310 = sbr.rel target = $region126
        $region125: #{tpu_custom_call.1} parent=31 // pred_region
          // Predicated region
          $region138: #{tpu_custom_call.1} parent=125 // pred_check
            _
          $region139: #{tpu_custom_call.1} parent=125 // pred_check_branch
            %326 = sbr.rel (0) target = $region141
          $region140: #{tpu_custom_call.1} parent=125 // pred_region
            %s328 = ssub.s32 2, 1
            loop: start=0, step=1, limit=1
            $region142: #{tpu_custom_call.1} parent=140 // loop_pre_header
              _
            $region143: #{tpu_custom_call.1} parent=140 // loop_header
              %s330 = sphi 0, %s334
              %p331 = scmp.ge.s32.totalorder %s330, 1
              %s335 = sphi %s307, %s307
              %s336 = sphi %s308, %s308
            $region144: #{tpu_custom_call.1} parent=140 // loop_header_branch
              %333 = sbr.rel (%p331) target = $region148
            $region145: #{tpu_custom_call.1} parent=140 // loop_body
              %v337 = vld [vmem:[%s335] sm:%s328]
              %338 = vst [vmem:[%s336] sm:%s328] %v337
            $region146: #{tpu_custom_call.1} parent=140 // loop_footer
              %s334 = sadd.s32 1, %s330
            $region147: #{tpu_custom_call.1} parent=140 // loop_footer_branch
              %329 = sbr.rel target = $region143
            $region148: #{tpu_custom_call.1} parent=140 // loop_exit
              _
          $region141: #{tpu_custom_call.1} parent=125 // pred_fallthru
            _
        $region126: #{tpu_custom_call.1} parent=31 // pred_fallthru
          _
        // Predicated region
        $region127: #{tpu_custom_call.1} parent=31 // pred_check
          _
        $region128: #{tpu_custom_call.1} parent=31 // pred_check_branch
          %312 = sbr.rel (0) target = $region130
        $region129: #{tpu_custom_call.1} parent=31 // pred_region
          %s314 = ssub.s32 2, 1
          loop: start=0, step=1, limit=1
          $region131: #{tpu_custom_call.1} parent=129 // loop_pre_header
            _
          $region132: #{tpu_custom_call.1} parent=129 // loop_header
            %s316 = sphi 0, %s320
            %p317 = scmp.ge.s32.totalorder %s316, 1
            %s321 = sphi %s307, %s307
            %s322 = sphi %s308, %s308
          $region133: #{tpu_custom_call.1} parent=129 // loop_header_branch
            %319 = sbr.rel (%p317) target = $region137
          $region134: #{tpu_custom_call.1} parent=129 // loop_body
            %v323 = vld [vmem:[%s321] sm:%s314]
            %324 = vst [vmem:[%s322] sm:%s314] %v323
          $region135: #{tpu_custom_call.1} parent=129 // loop_footer
            %s320 = sadd.s32 1, %s316
          $region136: #{tpu_custom_call.1} parent=129 // loop_footer_branch
            %315 = sbr.rel target = $region132
          $region137: #{tpu_custom_call.1} parent=129 // loop_exit
            _
        $region130: #{tpu_custom_call.1} parent=31 // pred_fallthru
          _
        // Predicated region
        $region149: #{tpu_custom_call.1} parent=31 // pred_check
          _
        $region150: #{tpu_custom_call.1} parent=31 // pred_check_branch
          %341 = sbr.rel (0) target = $region152
        $region151: #{tpu_custom_call.1} parent=31 // pred_region
          %342 = vsyncadd [#allocation3], 16
        $region152: #{tpu_custom_call.1} parent=31 // pred_fallthru
          _
        %s343 = sadd.s32 %s192, 4
        %s344 = sld [smem:[#allocation5 + %s343]]
        %s345 = scalar_lea.vmem %s1, %s344
        %s346 = scalar_lea.vmem [#allocation2], 4
        // Predicated region
        $region153: #{tpu_custom_call.1} parent=31 // pred_check
          _
        $region154: #{tpu_custom_call.1} parent=31 // pred_check_branch
          %348 = sbr.rel target = $region156
        $region155: #{tpu_custom_call.1} parent=31 // pred_region
          // Predicated region
          $region168: #{tpu_custom_call.1} parent=155 // pred_check
            _
          $region169: #{tpu_custom_call.1} parent=155 // pred_check_branch
            %364 = sbr.rel (0) target = $region171
          $region170: #{tpu_custom_call.1} parent=155 // pred_region
            %s366 = ssub.s32 2, 1
            loop: start=0, step=1, limit=1
            $region172: #{tpu_custom_call.1} parent=170 // loop_pre_header
              _
            $region173: #{tpu_custom_call.1} parent=170 // loop_header
              %s368 = sphi 0, %s372
              %p369 = scmp.ge.s32.totalorder %s368, 1
              %s373 = sphi %s345, %s345
              %s374 = sphi %s346, %s346
            $region174: #{tpu_custom_call.1} parent=170 // loop_header_branch
              %371 = sbr.rel (%p369) target = $region178
            $region175: #{tpu_custom_call.1} parent=170 // loop_body
              %v375 = vld [vmem:[%s373] sm:%s366]
              %376 = vst [vmem:[%s374] sm:%s366] %v375
            $region176: #{tpu_custom_call.1} parent=170 // loop_footer
              %s372 = sadd.s32 1, %s368
            $region177: #{tpu_custom_call.1} parent=170 // loop_footer_branch
              %367 = sbr.rel target = $region173
            $region178: #{tpu_custom_call.1} parent=170 // loop_exit
              _
          $region171: #{tpu_custom_call.1} parent=155 // pred_fallthru
            _
        $region156: #{tpu_custom_call.1} parent=31 // pred_fallthru
          _
        // Predicated region
        $region157: #{tpu_custom_call.1} parent=31 // pred_check
          _
        $region158: #{tpu_custom_call.1} parent=31 // pred_check_branch
          %350 = sbr.rel (0) target = $region160
        $region159: #{tpu_custom_call.1} parent=31 // pred_region
          %s352 = ssub.s32 2, 1
          loop: start=0, step=1, limit=1
          $region161: #{tpu_custom_call.1} parent=159 // loop_pre_header
            _
          $region162: #{tpu_custom_call.1} parent=159 // loop_header
            %s354 = sphi 0, %s358
            %p355 = scmp.ge.s32.totalorder %s354, 1
            %s359 = sphi %s345, %s345
            %s360 = sphi %s346, %s346
          $region163: #{tpu_custom_call.1} parent=159 // loop_header_branch
            %357 = sbr.rel (%p355) target = $region167
          $region164: #{tpu_custom_call.1} parent=159 // loop_body
            %v361 = vld [vmem:[%s359] sm:%s352]
            %362 = vst [vmem:[%s360] sm:%s352] %v361
          $region165: #{tpu_custom_call.1} parent=159 // loop_footer
            %s358 = sadd.s32 1, %s354
          $region166: #{tpu_custom_call.1} parent=159 // loop_footer_branch
            %353 = sbr.rel target = $region162
          $region167: #{tpu_custom_call.1} parent=159 // loop_exit
            _
        $region160: #{tpu_custom_call.1} parent=31 // pred_fallthru
          _
        // Predicated region
        $region179: #{tpu_custom_call.1} parent=31 // pred_check
          _
        $region180: #{tpu_custom_call.1} parent=31 // pred_check_branch
          %379 = sbr.rel (0) target = $region182
        $region181: #{tpu_custom_call.1} parent=31 // pred_region
          %380 = vsyncadd [#allocation3], 16
        $region182: #{tpu_custom_call.1} parent=31 // pred_fallthru
          _
        %s381 = sadd.s32 %s192, 5
        %s382 = sld [smem:[#allocation5 + %s381]]
        %s383 = scalar_lea.vmem %s1, %s382
        %s384 = scalar_lea.vmem [#allocation2], 5
        // Predicated region
        $region183: #{tpu_custom_call.1} parent=31 // pred_check
          _
        $region184: #{tpu_custom_call.1} parent=31 // pred_check_branch
          %386 = sbr.rel target = $region186
        $region185: #{tpu_custom_call.1} parent=31 // pred_region
          // Predicated region
          $region198: #{tpu_custom_call.1} parent=185 // pred_check
            _
          $region199: #{tpu_custom_call.1} parent=185 // pred_check_branch
            %402 = sbr.rel (0) target = $region201
          $region200: #{tpu_custom_call.1} parent=185 // pred_region
            %s404 = ssub.s32 2, 1
            loop: start=0, step=1, limit=1
            $region202: #{tpu_custom_call.1} parent=200 // loop_pre_header
              _
            $region203: #{tpu_custom_call.1} parent=200 // loop_header
              %s406 = sphi 0, %s410
              %p407 = scmp.ge.s32.totalorder %s406, 1
              %s411 = sphi %s383, %s383
              %s412 = sphi %s384, %s384
            $region204: #{tpu_custom_call.1} parent=200 // loop_header_branch
              %409 = sbr.rel (%p407) target = $region208
            $region205: #{tpu_custom_call.1} parent=200 // loop_body
              %v413 = vld [vmem:[%s411] sm:%s404]
              %414 = vst [vmem:[%s412] sm:%s404] %v413
            $region206: #{tpu_custom_call.1} parent=200 // loop_footer
              %s410 = sadd.s32 1, %s406
            $region207: #{tpu_custom_call.1} parent=200 // loop_footer_branch
              %405 = sbr.rel target = $region203
            $region208: #{tpu_custom_call.1} parent=200 // loop_exit
              _
          $region201: #{tpu_custom_call.1} parent=185 // pred_fallthru
            _
        $region186: #{tpu_custom_call.1} parent=31 // pred_fallthru
          _
        // Predicated region
        $region187: #{tpu_custom_call.1} parent=31 // pred_check
          _
        $region188: #{tpu_custom_call.1} parent=31 // pred_check_branch
          %388 = sbr.rel (0) target = $region190
        $region189: #{tpu_custom_call.1} parent=31 // pred_region
          %s390 = ssub.s32 2, 1
          loop: start=0, step=1, limit=1
          $region191: #{tpu_custom_call.1} parent=189 // loop_pre_header
            _
          $region192: #{tpu_custom_call.1} parent=189 // loop_header
            %s392 = sphi 0, %s396
            %p393 = scmp.ge.s32.totalorder %s392, 1
            %s397 = sphi %s383, %s383
            %s398 = sphi %s384, %s384
          $region193: #{tpu_custom_call.1} parent=189 // loop_header_branch
            %395 = sbr.rel (%p393) target = $region197
          $region194: #{tpu_custom_call.1} parent=189 // loop_body
            %v399 = vld [vmem:[%s397] sm:%s390]
            %400 = vst [vmem:[%s398] sm:%s390] %v399
          $region195: #{tpu_custom_call.1} parent=189 // loop_footer
            %s396 = sadd.s32 1, %s392
          $region196: #{tpu_custom_call.1} parent=189 // loop_footer_branch
            %391 = sbr.rel target = $region192
          $region197: #{tpu_custom_call.1} parent=189 // loop_exit
            _
        $region190: #{tpu_custom_call.1} parent=31 // pred_fallthru
          _
        // Predicated region
        $region209: #{tpu_custom_call.1} parent=31 // pred_check
          _
        $region210: #{tpu_custom_call.1} parent=31 // pred_check_branch
          %417 = sbr.rel (0) target = $region212
        $region211: #{tpu_custom_call.1} parent=31 // pred_region
          %418 = vsyncadd [#allocation3], 16
        $region212: #{tpu_custom_call.1} parent=31 // pred_fallthru
          _
        %s419 = sadd.s32 %s192, 6
        %s420 = sld [smem:[#allocation5 + %s419]]
        %s421 = scalar_lea.vmem %s1, %s420
        %s422 = scalar_lea.vmem [#allocation2], 6
        // Predicated region
        $region213: #{tpu_custom_call.1} parent=31 // pred_check
          _
        $region214: #{tpu_custom_call.1} parent=31 // pred_check_branch
          %424 = sbr.rel target = $region216
        $region215: #{tpu_custom_call.1} parent=31 // pred_region
          // Predicated region
          $region228: #{tpu_custom_call.1} parent=215 // pred_check
            _
          $region229: #{tpu_custom_call.1} parent=215 // pred_check_branch
            %440 = sbr.rel (0) target = $region231
          $region230: #{tpu_custom_call.1} parent=215 // pred_region
            %s442 = ssub.s32 2, 1
            loop: start=0, step=1, limit=1
            $region232: #{tpu_custom_call.1} parent=230 // loop_pre_header
              _
            $region233: #{tpu_custom_call.1} parent=230 // loop_header
              %s444 = sphi 0, %s448
              %p445 = scmp.ge.s32.totalorder %s444, 1
              %s449 = sphi %s421, %s421
              %s450 = sphi %s422, %s422
            $region234: #{tpu_custom_call.1} parent=230 // loop_header_branch
              %447 = sbr.rel (%p445) target = $region238
            $region235: #{tpu_custom_call.1} parent=230 // loop_body
              %v451 = vld [vmem:[%s449] sm:%s442]
              %452 = vst [vmem:[%s450] sm:%s442] %v451
            $region236: #{tpu_custom_call.1} parent=230 // loop_footer
              %s448 = sadd.s32 1, %s444
            $region237: #{tpu_custom_call.1} parent=230 // loop_footer_branch
              %443 = sbr.rel target = $region233
            $region238: #{tpu_custom_call.1} parent=230 // loop_exit
              _
          $region231: #{tpu_custom_call.1} parent=215 // pred_fallthru
            _
        $region216: #{tpu_custom_call.1} parent=31 // pred_fallthru
          _
        // Predicated region
        $region217: #{tpu_custom_call.1} parent=31 // pred_check
          _
        $region218: #{tpu_custom_call.1} parent=31 // pred_check_branch
          %426 = sbr.rel (0) target = $region220
        $region219: #{tpu_custom_call.1} parent=31 // pred_region
          %s428 = ssub.s32 2, 1
          loop: start=0, step=1, limit=1
          $region221: #{tpu_custom_call.1} parent=219 // loop_pre_header
            _
          $region222: #{tpu_custom_call.1} parent=219 // loop_header
            %s430 = sphi 0, %s434
            %p431 = scmp.ge.s32.totalorder %s430, 1
            %s435 = sphi %s421, %s421
            %s436 = sphi %s422, %s422
          $region223: #{tpu_custom_call.1} parent=219 // loop_header_branch
            %433 = sbr.rel (%p431) target = $region227
          $region224: #{tpu_custom_call.1} parent=219 // loop_body
            %v437 = vld [vmem:[%s435] sm:%s428]
            %438 = vst [vmem:[%s436] sm:%s428] %v437
          $region225: #{tpu_custom_call.1} parent=219 // loop_footer
            %s434 = sadd.s32 1, %s430
          $region226: #{tpu_custom_call.1} parent=219 // loop_footer_branch
            %429 = sbr.rel target = $region222
          $region227: #{tpu_custom_call.1} parent=219 // loop_exit
            _
        $region220: #{tpu_custom_call.1} parent=31 // pred_fallthru
          _
        // Predicated region
        $region239: #{tpu_custom_call.1} parent=31 // pred_check
          _
        $region240: #{tpu_custom_call.1} parent=31 // pred_check_branch
          %455 = sbr.rel (0) target = $region242
        $region241: #{tpu_custom_call.1} parent=31 // pred_region
          %456 = vsyncadd [#allocation3], 16
        $region242: #{tpu_custom_call.1} parent=31 // pred_fallthru
          _
        %s457 = sadd.s32 %s192, 7
        %s458 = sld [smem:[#allocation5 + %s457]]
        %s459 = scalar_lea.vmem %s1, %s458
        %s460 = scalar_lea.vmem [#allocation2], 7
        // Predicated region
        $region243: #{tpu_custom_call.1} parent=31 // pred_check
          _
        $region244: #{tpu_custom_call.1} parent=31 // pred_check_branch
          %462 = sbr.rel target = $region246
        $region245: #{tpu_custom_call.1} parent=31 // pred_region
          // Predicated region
          $region258: #{tpu_custom_call.1} parent=245 // pred_check
            _
          $region259: #{tpu_custom_call.1} parent=245 // pred_check_branch
            %478 = sbr.rel (0) target = $region261
          $region260: #{tpu_custom_call.1} parent=245 // pred_region
            %s480 = ssub.s32 2, 1
            loop: start=0, step=1, limit=1
            $region262: #{tpu_custom_call.1} parent=260 // loop_pre_header
              _
            $region263: #{tpu_custom_call.1} parent=260 // loop_header
              %s482 = sphi 0, %s486
              %p483 = scmp.ge.s32.totalorder %s482, 1
              %s487 = sphi %s459, %s459
              %s488 = sphi %s460, %s460
            $region264: #{tpu_custom_call.1} parent=260 // loop_header_branch
              %485 = sbr.rel (%p483) target = $region268
            $region265: #{tpu_custom_call.1} parent=260 // loop_body
              %v489 = vld [vmem:[%s487] sm:%s480]
              %490 = vst [vmem:[%s488] sm:%s480] %v489
            $region266: #{tpu_custom_call.1} parent=260 // loop_footer
              %s486 = sadd.s32 1, %s482
            $region267: #{tpu_custom_call.1} parent=260 // loop_footer_branch
              %481 = sbr.rel target = $region263
            $region268: #{tpu_custom_call.1} parent=260 // loop_exit
              _
          $region261: #{tpu_custom_call.1} parent=245 // pred_fallthru
            _
        $region246: #{tpu_custom_call.1} parent=31 // pred_fallthru
          _
        // Predicated region
        $region247: #{tpu_custom_call.1} parent=31 // pred_check
          _
        $region248: #{tpu_custom_call.1} parent=31 // pred_check_branch
          %464 = sbr.rel (0) target = $region250
        $region249: #{tpu_custom_call.1} parent=31 // pred_region
          %s466 = ssub.s32 2, 1
          loop: start=0, step=1, limit=1
          $region251: #{tpu_custom_call.1} parent=249 // loop_pre_header
            _
          $region252: #{tpu_custom_call.1} parent=249 // loop_header
            %s468 = sphi 0, %s472
            %p469 = scmp.ge.s32.totalorder %s468, 1
            %s473 = sphi %s459, %s459
            %s474 = sphi %s460, %s460
          $region253: #{tpu_custom_call.1} parent=249 // loop_header_branch
            %471 = sbr.rel (%p469) target = $region257
          $region254: #{tpu_custom_call.1} parent=249 // loop_body
            %v475 = vld [vmem:[%s473] sm:%s466]
            %476 = vst [vmem:[%s474] sm:%s466] %v475
          $region255: #{tpu_custom_call.1} parent=249 // loop_footer
            %s472 = sadd.s32 1, %s468
          $region256: #{tpu_custom_call.1} parent=249 // loop_footer_branch
            %467 = sbr.rel target = $region252
          $region257: #{tpu_custom_call.1} parent=249 // loop_exit
            _
        $region250: #{tpu_custom_call.1} parent=31 // pred_fallthru
          _
        // Predicated region
        $region269: #{tpu_custom_call.1} parent=31 // pred_check
          _
        $region270: #{tpu_custom_call.1} parent=31 // pred_check_branch
          %493 = sbr.rel (0) target = $region272
        $region271: #{tpu_custom_call.1} parent=31 // pred_region
          %494 = vsyncadd [#allocation3], 16
        $region272: #{tpu_custom_call.1} parent=31 // pred_fallthru
          _
        %v495 = vld [vmem:[%s3] sm:$0x1]
        %v496 = vld [vmem:[%s4] sm:$0x1]
        %s497 = smul.u32 8, 1
        %s498 = sshll.u32 %s497, 4
        %499 = dma.done [#allocation3], %s498
        %v500 = vld [vmem:[#allocation2] sm:$0xff]
        %v501 = vld [vmem:[%s189] sm:$0xff]
        %v502 = vadd.f32 %v500, %v501
        %vm503 = vcmask 261120
        %v504 = vsel %vm503, %v502, 0.0
        %505 = vadd.xlane.f32.xlu0 %v504
        %v506 = vpop.xlane.xlu0 %505
        %v507 = vrcp.pop 32.0
        %v508 = vmul.f32 32.0, %v507
        %v509 = vsub.f32 1.0, %v508
        %v510 = vmul.f32 %v507, %v509
        %v511 = vadd.f32 %v507, %v510
        %vm512 = vweird.f32 %v507
        %v513 = vsel %vm512, %v507, %v511
        %v514 = vmul.f32 %v506, %v513
        %v515 = vsub.f32 %v502, %v514
        %v516 = vmul.f32 %v515, %v515
        %v517 = vsel %vm503, %v516, 0.0
        %518 = vadd.xlane.f32.xlu0 %v517
        %v519 = vpop.xlane.xlu0 %518
        %v520 = vmul.f32 %v519, %v513
        %v521 = vadd.f32 %v520, 1e-12
        %v522 = vrsqrt.pop %v521
        %v523 = vmul.f32 %v522, %v521
        %v524 = vmul.f32 %v523, %v522
        %v525 = vmul.f32 0.5, %v524
        %v526 = vsub.f32 1.5, %v525
        %v527 = vmul.f32 %v522, %v526
        %vm528 = vweird.f32 %v521
        %vm529 = vweird.f32 %v522
        %vm530 = vmor %vm528, %vm529
        %v531 = vsel %vm530, %v522, %v527
        %v532 = vmul.f32 %v515, %v531
        %v534 = vperm.slane %v495, 0
        %v536 = vmul.f32 %v532, %v534
        %v538 = vperm.slane %v496, 0
        %v540 = vadd.f32 %v536, %v538
        %541 = vst.msk [vmem:[%s185] sm:$0xff] %vm503, %v540
        %s542 = sand.u32 %s117, 1
        %s543 = scalar_lea.sflag [#allocation7], %s542
        %s544 = sand.u32 %s117, 1
        %s545 = smul.addr %s544, 8
        %s546 = scalar_lea.vmem [#allocation6], %s545
        // Predicated region
        $region273: #{tpu_custom_call.1} parent=31 // pred_check
          %p547 = pneg %p127
        $region274: #{tpu_custom_call.1} parent=31 // pred_check_branch
          %549 = sbr.rel (%p547) target = $region276
        $region275: #{tpu_custom_call.1} parent=31 // pred_region
          %551 = vsyncadd %s543, 0
          %s552 = smul.addr %s32, 2
          %s553 = sadd.s32 %s31, %s552
          %s554 = smul.addr %s553, 8
          %s555 = scalar_lea.hbm %s5, %s554
          %s557 = sshll.u32 %s546, 4
          %s558 = int_to_ptr.vmem [resolvable:$true] %s557
          %s559 = sshll.u32 %s555, 4
          %s560 = int_to_ptr.hbm [resolvable:$true] %s559
          %562 = dma.vmem_to_hbm [thread:$0]  %s558, 128, %s560, %s543
        $region276: #{tpu_custom_call.1} parent=31 // pred_fallthru
          _
      $region32: #{tpu_custom_call.1} parent=5 // pred_fallthru
        _
      %p563 = scmp.le.s32.totalorder 2, %s22
      // Predicated region
      $region277: #{tpu_custom_call.1} parent=5 // pred_check
        %p564 = pneg %p563
      $region278: #{tpu_custom_call.1} parent=5 // pred_check_branch
        %566 = sbr.rel (%p564) target = $region280
      $region279: #{tpu_custom_call.1} parent=5 // pred_region
        %s567 = ssub.s32 %s22, 2
        // Predicated region
        $region281: #{tpu_custom_call.1} parent=279 // pred_check
          %p568 = pneg %p133
        $region282: #{tpu_custom_call.1} parent=279 // pred_check_branch
          %570 = sbr.rel (%p568) target = $region284
        $region283: #{tpu_custom_call.1} parent=279 // pred_region
          %s571 = sand.u32 %s118, 1
          %s572 = scalar_lea.sflag [#allocation7], %s571
          %s573 = sand.u32 %s118, 1
          %s574 = smul.addr %s573, 8
          %s575 = scalar_lea.vmem [#allocation6], %s574
          %577 = dma.done %s572, 128
        $region284: #{tpu_custom_call.1} parent=279 // pred_fallthru
          _
      $region280: #{tpu_custom_call.1} parent=5 // pred_fallthru
        _
    $region6: #{tpu_custom_call.1} parent=1 // loop_footer
      %s26 = sadd.s32 1, %s22
    $region7: #{tpu_custom_call.1} parent=1 // loop_footer_branch
      %21 = sbr.rel target = $region3
    $region8: #{tpu_custom_call.1} parent=1 // loop_exit
      _
    %578 = vsyncpa [#allocation7], 1
    %s579 = scalar_lea.sflag [#allocation7], 1
    %580 = vsyncpa %s579, 1
  %581 = vsyncmov [#allocation3]
  %s582 = vpop.sfrf %581
  %p583 = scmp.eq.s32.totalorder %s582, 0
  %p584 = pneg %p583
  %586 = shalt.err (%p584)

</llo_original>
